<compile_context>
chip_gen: v5e
topology: v5e:2x2
jax: 0.10.0
libtpu: 0.0.40
codegen_flags: <defaults>
</compile_context>

<pallas_src>
import jax
import jax.numpy as jnp
from jax.experimental import pallas as pl
from jax.experimental.pallas import tpu as pltpu


def _flatten_hidden_kernel(h_ref, c_ref, h_out_ref, c_out_ref):
    # h_ref/c_ref block: (L, D, chunk)   ->  out block: (L, chunk)
    num_direction = h_ref.shape[1]
    inv_d = 1.0 / num_direction
    for src_ref, dst_ref in ((h_ref, h_out_ref), (c_ref, c_out_ref)):
        x = src_ref[...]                              # (L, D, chunk)
        acc = x[:, 0, :].astype(jnp.float32)
        for d in range(1, num_direction):             # D is tiny & static: unroll
            acc = acc + x[:, d, :].astype(jnp.float32)
        dst_ref[...] = (acc * inv_d).astype(dst_ref.dtype)


def _pick_lane_chunk(bh, rows, itemsize, budget_bytes=8 << 20):
    """Largest lane chunk (multiple of 128 dividing bh) so one input block
    (rows * chunk * itemsize) stays under a conservative per-buffer budget.
    Falls back to the full lane extent for small states / awkward sizes."""
    if rows * bh * itemsize <= budget_bytes or bh % 128 != 0:
        return bh
    max_chunk = max(128, (budget_bytes // (rows * itemsize)) // 128 * 128)
    chunk = min(max_chunk, bh)
    chunk = (chunk // 128) * 128
    while chunk >= 128:
        if bh % chunk == 0:
            return chunk
        chunk -= 128
    return bh


def flatten_hidden_lstm(h_n, c_n, lstm_num_layer, is_bidirectional):
    """Pallas equivalent of FlattenHiddenLSTM.forward.

    h_n, c_n: (lstm_num_layer * num_direction, batch, hidden)
    returns:  two arrays of shape (lstm_num_layer, batch, hidden)
    """
    num_direction = 2 if is_bidirectional else 1
    total, batch, hidden = h_n.shape
    assert total == lstm_num_layer * num_direction
    assert c_n.shape == h_n.shape

    L, D, B, H = lstm_num_layer, num_direction, batch, hidden

    if D == 1:
        # Mean over a single direction is the identity: metadata-only reshape,
        # skip the HBM->VMEM->HBM round trip and kernel launch entirely.
        return h_n.reshape(L, B, H), c_n.reshape(L, B, H)

    BH = B * H
    itemsize = jnp.dtype(h_n.dtype).itemsize

    # Lane-dense 2D-ish layout; reshape of a contiguous array is free.
    h2 = h_n.reshape(L, D, BH)
    c2 = c_n.reshape(L, D, BH)

    chunk = _pick_lane_chunk(BH, rows=L * D, itemsize=itemsize)
    n_chunks = BH // chunk

    out_shape2 = jax.ShapeDtypeStruct((L, BH), h_n.dtype)
    in_spec = pl.BlockSpec((L, D, chunk), lambda j: (0, 0, j))
    out_spec = pl.BlockSpec((L, chunk), lambda j: (0, j))

    out_bytes = 2 * L * BH * itemsize
    cost = pl.CostEstimate(
        flops=2 * L * D * BH,               # unrolled adds + final scale, both tensors
        transcendentals=0,
        bytes_accessed=h_n.nbytes + c_n.nbytes + out_bytes,
    )

    h_flat2, c_flat2 = pl.pallas_call(
        _flatten_hidden_kernel,
        out_shape=(out_shape2, out_shape2),
        grid=(n_chunks,),
        in_specs=[in_spec, in_spec],
        out_specs=[out_spec, out_spec],
        compiler_params=pltpu.CompilerParams(
            dimension_semantics=("parallel",),
        ),
        cost_estimate=cost,
    )(h2, c2)

    return h_flat2.reshape(L, B, H), c_flat2.reshape(L, B, H)


def _reference(h_n, c_n, lstm_num_layer, is_bidirectional):
    num_direction = 2 if is_bidirectional else 1

    def flat(x):
        B, H = x.shape[1], x.shape[2]
        return x.reshape(lstm_num_layer, num_direction, B, H).mean(axis=1)

    return flat(h_n), flat(c_n)


if __name__ == "__main__":
    lstm_num_layer = 2
    batch = 2
    hidden = 32

    key = jax.random.PRNGKey(0)
    kh, kc, kh1, kc1 = jax.random.split(key, 4)

    # --- bidirectional: exercises the Pallas kernel path ---
    is_bidirectional = True
    num_direction = 2
    h_n = jax.random.normal(
        kh, (lstm_num_layer * num_direction, batch, hidden), dtype=jnp.float32
    )
    c_n = jax.random.normal(
        kc, (lstm_num_layer * num_direction, batch, hidden), dtype=jnp.float32
    )
    h_flat, c_flat = flatten_hidden_lstm(h_n, c_n, lstm_num_layer, is_bidirectional)
    jax.block_until_ready((h_flat, c_flat))

    h_ref, c_ref = _reference(h_n, c_n, lstm_num_layer, is_bidirectional)
    assert h_flat.shape == (lstm_num_layer, batch, hidden)
    assert c_flat.shape == (lstm_num_layer, batch, hidden)
    assert jnp.allclose(h_flat, h_ref, atol=1e-6)
    assert jnp.allclose(c_flat, c_ref, atol=1e-6)

    # --- unidirectional: exercises the kernel-bypass (identity reshape) path ---
    h_n1 = jax.random.normal(kh1, (lstm_num_layer, batch, hidden), dtype=jnp.float32)
    c_n1 = jax.random.normal(kc1, (lstm_num_layer, batch, hidden), dtype=jnp.float32)
    h_f1, c_f1 = flatten_hidden_lstm(h_n1, c_n1, lstm_num_layer, False)
    jax.block_until_ready((h_f1, c_f1))
    h_r1, c_r1 = _reference(h_n1, c_n1, lstm_num_layer, False)
    assert jnp.allclose(h_f1, h_r1, atol=1e-6)
    assert jnp.allclose(c_f1, c_r1, atol=1e-6)

    print("KERNEL_OK")
</pallas_src>

<mosaic_0001>
module attributes {stable_mosaic.version = 11 : i64} {
  func.func @_flatten_hidden_kernel(%arg0: i32, %arg1: memref<2x2x64xf32, #tpu.memory_space<vmem>>, %arg2: memref<2x2x64xf32, #tpu.memory_space<vmem>>, %arg3: memref<2x64xf32, #tpu.memory_space<vmem>>, %arg4: memref<2x64xf32, #tpu.memory_space<vmem>>) attributes {dimension_semantics = [#tpu.dimension_semantics<parallel>], iteration_bounds = array<i64: 1>, scalar_prefetch = 0 : i64, scratch_operands = 0 : i64, tpu.core_type = #tpu.core_type<tc>, window_params = [{transform_indices = @transform_0, window_bounds = array<i64: 2, 2, 64>}, {transform_indices = @transform_1, window_bounds = array<i64: 2, 2, 64>}, {transform_indices = @transform_2, window_bounds = array<i64: 2, 64>}, {transform_indices = @transform_3, window_bounds = array<i64: 2, 64>}]} {
    %c0 = arith.constant 0 : index
    %c0_0 = arith.constant 0 : index
    %c0_1 = arith.constant 0 : index
    %0 = vector.load %arg1[%c0, %c0_0, %c0_1] : memref<2x2x64xf32, #tpu.memory_space<vmem>>, vector<2x2x64xf32>
    %1 = vector.extract_strided_slice %0 {offsets = [0, 0, 0], sizes = [2, 1, 64], strides = [1, 1, 1]} : vector<2x2x64xf32> to vector<2x1x64xf32>
    %2 = vector.shape_cast %1 : vector<2x1x64xf32> to vector<2x64xf32>
    %3 = vector.extract_strided_slice %0 {offsets = [0, 1, 0], sizes = [2, 1, 64], strides = [1, 1, 1]} : vector<2x2x64xf32> to vector<2x1x64xf32>
    %4 = vector.shape_cast %3 : vector<2x1x64xf32> to vector<2x64xf32>
    %5 = arith.addf %2, %4 : vector<2x64xf32>
    %cst = arith.constant 5.000000e-01 : f32
    %6 = vector.broadcast %cst : f32 to vector<2x64xf32>
    %7 = arith.mulf %5, %6 : vector<2x64xf32>
    %c0_2 = arith.constant 0 : index
    %c0_3 = arith.constant 0 : index
    %8 = vector.load %arg3[%c0_2, %c0_3] : memref<2x64xf32, #tpu.memory_space<vmem>>, vector<2x64xf32>
    tpu.vector_store %arg3[%c0_2, %c0_3], %7 {strides = array<i32>} : memref<2x64xf32, #tpu.memory_space<vmem>>, vector<2x64xf32>,
    %c0_4 = arith.constant 0 : index
    %c0_5 = arith.constant 0 : index
    %c0_6 = arith.constant 0 : index
    %9 = vector.load %arg2[%c0_4, %c0_5, %c0_6] : memref<2x2x64xf32, #tpu.memory_space<vmem>>, vector<2x2x64xf32>
    %10 = vector.extract_strided_slice %9 {offsets = [0, 0, 0], sizes = [2, 1, 64], strides = [1, 1, 1]} : vector<2x2x64xf32> to vector<2x1x64xf32>
    %11 = vector.shape_cast %10 : vector<2x1x64xf32> to vector<2x64xf32>
    %12 = vector.extract_strided_slice %9 {offsets = [0, 1, 0], sizes = [2, 1, 64], strides = [1, 1, 1]} : vector<2x2x64xf32> to vector<2x1x64xf32>
    %13 = vector.shape_cast %12 : vector<2x1x64xf32> to vector<2x64xf32>
    %14 = arith.addf %11, %13 : vector<2x64xf32>
    %cst_7 = arith.constant 5.000000e-01 : f32
    %15 = vector.broadcast %cst_7 : f32 to vector<2x64xf32>
    %16 = arith.mulf %14, %15 : vector<2x64xf32>
    %c0_8 = arith.constant 0 : index
    %c0_9 = arith.constant 0 : index
    %17 = vector.load %arg4[%c0_8, %c0_9] : memref<2x64xf32, #tpu.memory_space<vmem>>, vector<2x64xf32>
    tpu.vector_store %arg4[%c0_8, %c0_9], %16 {strides = array<i32>} : memref<2x64xf32, #tpu.memory_space<vmem>>, vector<2x64xf32>,
    return
  }
  func.func @transform_0(%arg0: i32) -> (i32, i32, i32) {
    %c0_i32 = arith.constant 0 : i32
    %c0_i32_0 = arith.constant 0 : i32
    %c0_i32_1 = arith.constant 0 : i32
    return %c0_i32, %c0_i32_0, %arg0 : i32, i32, i32
  }
  func.func @transform_1(%arg0: i32) -> (i32, i32, i32) {
    %c0_i32 = arith.constant 0 : i32
    %c0_i32_0 = arith.constant 0 : i32
    %c0_i32_1 = arith.constant 0 : i32
    return %c0_i32, %c0_i32_0, %arg0 : i32, i32, i32
  }
  func.func @transform_2(%arg0: i32) -> (i32, i32) {
    %c0_i32 = arith.constant 0 : i32
    %c0_i32_0 = arith.constant 0 : i32
    return %c0_i32, %arg0 : i32, i32
  }
  func.func @transform_3(%arg0: i32) -> (i32, i32) {
    %c0_i32 = arith.constant 0 : i32
    %c0_i32_0 = arith.constant 0 : i32
    return %c0_i32, %arg0 : i32, i32
  }
}

</mosaic_0001>

<llo_original>
// kernel: tpu_custom_call.1
$region0: #{tpu_custom_call.1}
  #allocation0 [shape = 'u32[]', space=smem, size = 0x4, offset = 0x4, fixed_abs, tag = 'smem constant byte address 0x4 - core index']
  #allocation1 [shape = 'u32[72,128]{1,0:T(1,128)}', space=vmem, size = 0x9000, scoped, tag = 'internal scratch']
  %s0 = inlined_call_operand.hbm [shape: f32[2,2,64], index: 0, kind: input, shape index: {}]
  %s1 = inlined_call_operand.hbm [shape: f32[2,2,64], index: 1, kind: input, shape index: {}]
  %s2 = inlined_call_operand.hbm [shape: f32[2,64], index: 2, kind: output, shape index: {0}]
  %s3 = inlined_call_operand.hbm [shape: f32[2,64], index: 3, kind: output, shape index: {1}]
  %4 = xla_tuple %s2, %s3
  %s5 = sld [smem:[#allocation0]]
  $region34: #{tpu_custom_call.1} parent=0
    _
  %s7 = ssub.s32 1, %s5
  %s8 = scalar_select 0, %s7, %s5
  $region1: #{tpu_custom_call.1} parent=0
    #allocation2 [shape = 'u8[2048]{0}', space=vmem, size = 0x800, scoped, tag = 'input window, operand 0, single buffered']
    #allocation3 [shape = 's32[1]{0}', space=sflag, size = 0x4, scoped, tag = 'scoped memory for tpu_custom_call.1']
    #allocation4 [shape = 's32[1]{0}', space=sflag, size = 0x4, scoped, tag = 'scoped memory for tpu_custom_call.1']
    #allocation5 [shape = 'u8[2048]{0}', space=vmem, size = 0x800, scoped, tag = 'input window, operand 1, single buffered']
    #allocation6 [shape = 's32[1]{0}', space=sflag, size = 0x4, scoped, tag = 'scoped memory for tpu_custom_call.1']
    #allocation7 [shape = 'u8[1024]{0}', space=vmem, size = 0x400, scoped, tag = 'output window, operand 0, single buffered']
    #allocation8 [shape = 'u8[1024]{0}', space=vmem, size = 0x400, scoped, tag = 'output window, operand 1, single buffered']
    #allocation9 [shape = 's32[1]{0}', space=sflag, size = 0x4, scoped, tag = 'scoped memory for tpu_custom_call.1']
    %9 = vsyncpa [#allocation3], 0
    %10 = vsyncpa [#allocation6], 0
    %11 = vsyncpa [#allocation4], 0
    %12 = vsyncpa [#allocation9], 0
    // Predicated region
    $region2: #{tpu_custom_call.1} parent=1 // pred_check
      _
    $region3: #{tpu_custom_call.1} parent=1 // pred_check_branch
      %14 = sbr.rel (0) target = $region5
    $region4: #{tpu_custom_call.1} parent=1 // pred_region
      %16 = vsyncadd [#allocation3], 0
      %s17 = sshll.u32 %s0, 4
      %s18 = int_to_ptr.hbm [resolvable:$true] %s17
      %s19 = sshll.u32 [#allocation2], 4
      %s20 = int_to_ptr.vmem [resolvable:$true] %s19
      %25 = dma.hbm_to_vmem [thread:$0]  %s18, 64, %s20, [#allocation3], 32, 32, 2
    $region5: #{tpu_custom_call.1} parent=1 // pred_fallthru
      _
    // Predicated region
    $region6: #{tpu_custom_call.1} parent=1 // pred_check
      _
    $region7: #{tpu_custom_call.1} parent=1 // pred_check_branch
      %27 = sbr.rel (0) target = $region9
    $region8: #{tpu_custom_call.1} parent=1 // pred_region
      %29 = vsyncadd [#allocation6], 0
      %s30 = sshll.u32 %s1, 4
      %s31 = int_to_ptr.hbm [resolvable:$true] %s30
      %s32 = sshll.u32 [#allocation5], 4
      %s33 = int_to_ptr.vmem [resolvable:$true] %s32
      %38 = dma.hbm_to_vmem [thread:$0]  %s31, 64, %s33, [#allocation6], 32, 32, 2
    $region9: #{tpu_custom_call.1} parent=1 // pred_fallthru
      _
    // Predicated region
    $region10: #{tpu_custom_call.1} parent=1 // pred_check
      _
    $region11: #{tpu_custom_call.1} parent=1 // pred_check_branch
      %40 = sbr.rel (0) target = $region13
    $region12: #{tpu_custom_call.1} parent=1 // pred_region
      %42 = dma.done [#allocation3], 64
    $region13: #{tpu_custom_call.1} parent=1 // pred_fallthru
      _
    // Predicated region
    $region14: #{tpu_custom_call.1} parent=1 // pred_check
      _
    $region15: #{tpu_custom_call.1} parent=1 // pred_check_branch
      %44 = sbr.rel (0) target = $region17
    $region16: #{tpu_custom_call.1} parent=1 // pred_region
      %46 = dma.done [#allocation6], 64
    $region17: #{tpu_custom_call.1} parent=1 // pred_fallthru
      _
    %v47 = vld [vmem:[#allocation2] sm:$0x3]
    %v48 = vld [vmem:[#allocation2 + $0x2] sm:$0x3]
    %v51 = vrot.slane %v47, 1
    %v52 = vrot.slane %v48, 1
    %v55 = vadd.f32 %v47, %v51
    %v56 = vadd.f32 %v48, %v52
    %v57 = vmul.f32 %v55, 0.5
    %v58 = vmul.f32 %v56, 0.5
    %v61 = vrot.slane %v58, 7
    %vm62 = vcmask 1041409
    %v63 = vsel %vm62, %v61, %v57
    %vm65 = vcmask 517120
    %66 = vst.msk [vmem:[#allocation7] sm:$0x3] %vm65, %v63
    %v67 = vld [vmem:[#allocation5] sm:$0x3]
    %v68 = vld [vmem:[#allocation5 + $0x2] sm:$0x3]
    %v71 = vrot.slane %v67, 1
    %v72 = vrot.slane %v68, 1
    %v75 = vadd.f32 %v67, %v71
    %v76 = vadd.f32 %v68, %v72
    %v77 = vmul.f32 %v75, 0.5
    %v78 = vmul.f32 %v76, 0.5
    %v81 = vrot.slane %v78, 7
    %v82 = vsel %vm62, %v81, %v77
    %84 = vst.msk [vmem:[#allocation8] sm:$0x3] %vm65, %v82
    // Predicated region
    $region18: #{tpu_custom_call.1} parent=1 // pred_check
      _
    $region19: #{tpu_custom_call.1} parent=1 // pred_check_branch
      %86 = sbr.rel (0) target = $region21
    $region20: #{tpu_custom_call.1} parent=1 // pred_region
      %88 = vsyncadd [#allocation4], 0
      %s90 = sshll.u32 [#allocation7], 4
      %s91 = int_to_ptr.vmem [resolvable:$true] %s90
      %s92 = sshll.u32 %s2, 4
      %s93 = int_to_ptr.hbm [resolvable:$true] %s92
      %95 = dma.vmem_to_hbm [thread:$0]  %s91, 32, %s93, [#allocation4]
    $region21: #{tpu_custom_call.1} parent=1 // pred_fallthru
      _
    // Predicated region
    $region22: #{tpu_custom_call.1} parent=1 // pred_check
      _
    $region23: #{tpu_custom_call.1} parent=1 // pred_check_branch
      %97 = sbr.rel (0) target = $region25
    $region24: #{tpu_custom_call.1} parent=1 // pred_region
      %99 = vsyncadd [#allocation9], 0
      %s101 = sshll.u32 [#allocation8], 4
      %s102 = int_to_ptr.vmem [resolvable:$true] %s101
      %s103 = sshll.u32 %s3, 4
      %s104 = int_to_ptr.hbm [resolvable:$true] %s103
      %106 = dma.vmem_to_hbm [thread:$0]  %s102, 32, %s104, [#allocation9]
    $region25: #{tpu_custom_call.1} parent=1 // pred_fallthru
      _
    // Predicated region
    $region26: #{tpu_custom_call.1} parent=1 // pred_check
      _
    $region27: #{tpu_custom_call.1} parent=1 // pred_check_branch
      %108 = sbr.rel (0) target = $region29
    $region28: #{tpu_custom_call.1} parent=1 // pred_region
      %110 = dma.done [#allocation4], 32
    $region29: #{tpu_custom_call.1} parent=1 // pred_fallthru
      _
    // Predicated region
    $region30: #{tpu_custom_call.1} parent=1 // pred_check
      _
    $region31: #{tpu_custom_call.1} parent=1 // pred_check_branch
      %112 = sbr.rel (0) target = $region33
    $region32: #{tpu_custom_call.1} parent=1 // pred_region
      %114 = dma.done [#allocation9], 32
    $region33: #{tpu_custom_call.1} parent=1 // pred_fallthru
      _
    %115 = vsyncpa [#allocation3], 1
    %116 = vsyncpa [#allocation6], 1
    %117 = vsyncpa [#allocation4], 1
    %118 = vsyncpa [#allocation9], 1

</llo_original>
